<compile_context>
chip_gen: v7x
topology: tpu7x:2x2x1
jax: 0.10.0
libtpu: 0.0.40
codegen_flags: <defaults>
</compile_context>

<pallas_src>
import functools

import jax
import jax.numpy as jnp
from jax.experimental import pallas as pl
from jax.experimental.pallas import tpu as pltpu


def _round_up(x, m):
    return ((x + m - 1) // m) * m


def _vmem_limit_bytes():
    # Generation-aware scoped-VMEM budget (~3/4 of physical capacity):
    # ~96 MiB on v5e/v6e (128 MiB physical), ~48 MiB on v7x (64 MiB physical).
    try:
        cap = int(pltpu.get_tpu_info().vmem_capacity_bytes)
    except Exception:
        cap = 64 * 1024 * 1024
    return (cap * 3) // 4


VMEM_LIMIT = _vmem_limit_bytes()


# ----------------------------------------------------------------------------
# Pallas kernels
# ----------------------------------------------------------------------------
def _encoder_kernel(x_ref, w1_ref, b1_ref, w2_ref, b2_ref, o_ref):
    # Fused: relu(x @ W1 + b1) @ W2 + b2 ; intermediate never leaves VMEM.
    h = jnp.dot(x_ref[...], w1_ref[...], preferred_element_type=jnp.float32)
    h = jnp.maximum(h + b1_ref[...], 0.0)
    y = jnp.dot(h, w2_ref[...], preferred_element_type=jnp.float32) + b2_ref[...]
    o_ref[...] = y.astype(o_ref.dtype)


def _xw_scale_kernel(x_ref, w_ref, s_ref, o_ref):
    # xw = (x @ W) * d_out^-1/2  -> bf16 (MXU input for the O(N^2) aggregation).
    # bf16 MXU operands with f32 accumulation (perf-review item).
    xw = jnp.dot(x_ref[...].astype(jnp.bfloat16),
                 w_ref[...].astype(jnp.bfloat16),
                 preferred_element_type=jnp.float32)
    o_ref[...] = (xw * s_ref[...]).astype(o_ref.dtype)


def _gcn_agg_kernel(blk_ref, cnt_ref, a_ref, xwk_ref, xwi_ref, dinv_ref, b_ref,
                    o_ref, acc_ref, *, relu):
    # out[i] = dinv_in[i] * ( sum_{k in nonzero blocks} A[i,k] @ xw[k] + xw[i] ) + b
    i = pl.program_id(0)
    k = pl.program_id(1)

    @pl.when(k == 0)
    def _():
        acc_ref[...] = jnp.zeros_like(acc_ref)

    # Block-sparse walk: only the first cnt[i] (nonzero) src blocks contribute;
    # padded steps repeat the previous block index (no new DMA) and skip the MXU.
    @pl.when(k < cnt_ref[i])
    def _():
        acc_ref[...] += jnp.dot(a_ref[...], xwk_ref[...],
                                preferred_element_type=jnp.float32)

    @pl.when(k == pl.num_programs(1) - 1)
    def _():
        y = acc_ref[...] + xwi_ref[...].astype(jnp.float32)   # add self-loop
        y = y * dinv_ref[...] + b_ref[...]
        if relu:
            y = jnp.maximum(y, 0.0)
        o_ref[...] = y.astype(o_ref.dtype)


def _score_kernel(hT_ref, w1T_ref, b1_ref, w2T_ref, b2_ref, o_ref):
    # Edges on the LANE axis; one [H1,3H]@[3H,te] matmul (no [E,3H] concat in HBM
    # slices, no per-block split); final store is a (1, te) lane-dense slab.
    z = jnp.dot(w1T_ref[...], hT_ref[...], preferred_element_type=jnp.float32)
    z = jnp.maximum(z + b1_ref[...], 0.0)                                  # [H1, te]
    s = jnp.dot(w2T_ref[...], z, preferred_element_type=jnp.float32) + b2_ref[...]
    o_ref[...] = s.astype(o_ref.dtype)                                     # [1, te]


# ----------------------------------------------------------------------------
# Wrappers
# ----------------------------------------------------------------------------
def pallas_encoder(x, w1, b1_row, w2, b2_row, *, row_tile=512):
    R, F = x.shape
    H1 = w1.shape[1]
    H2 = w2.shape[1]
    rt = min(row_tile, _round_up(R, 8))
    Rpad = _round_up(R, rt)
    xp = jnp.pad(x, ((0, Rpad - R), (0, 0)))
    out = pl.pallas_call(
        _encoder_kernel,
        out_shape=jax.ShapeDtypeStruct((Rpad, H2), jnp.float32),
        grid=(Rpad // rt,),
        in_specs=[
            pl.BlockSpec((rt, F), lambda i: (i, 0)),
            pl.BlockSpec((F, H1), lambda i: (0, 0)),
            pl.BlockSpec((1, H1), lambda i: (0, 0)),
            pl.BlockSpec((H1, H2), lambda i: (0, 0)),
            pl.BlockSpec((1, H2), lambda i: (0, 0)),
        ],
        out_specs=pl.BlockSpec((rt, H2), lambda i: (i, 0)),
        compiler_params=pltpu.CompilerParams(
            dimension_semantics=("parallel",),
            vmem_limit_bytes=VMEM_LIMIT),
    )(xp, w1, b1_row, w2, b2_row)
    return out[:R]


def _build_block_schedule(src, dst, Npad, tm, tk):
    """Per dst row-tile: the number of NONZERO src blocks and their block indices,
    left-packed; padded entries repeat the last valid index so padded grid steps
    reuse the previously fetched A tile (no new DMA) and skip the MXU."""
    nd = Npad // tm
    nb = Npad // tk
    hits = jnp.zeros((nd, nb), jnp.int32).at[dst // tm, src // tk].add(1)
    mask = (hits > 0).astype(jnp.int32)
    counts = mask.sum(axis=1).astype(jnp.int32)
    order = jnp.argsort(-mask, axis=1).astype(jnp.int32)   # nonzero blocks first
    last = order[jnp.arange(nd), jnp.maximum(counts - 1, 0)]
    col = jnp.arange(nb, dtype=jnp.int32)[None, :]
    blkids = jnp.where(col < counts[:, None], order, last[:, None])
    try:  # static grid extent = max #nonzero blocks over all dst row-tiles
        kt = max(1, int(counts.max()))
    except Exception:  # traced (e.g. under jit): fall back to the dense walk
        kt = nb
    blkids = blkids[:, :kt].reshape(-1).astype(jnp.int32)  # flat 1-D SMEM layout
    return blkids, counts, kt


def pallas_gcn_layer(h_pad, a_bf16, dinv_out, dinv_in, w, b_row,
                     blkids, counts, kt, *, relu, tm, tk):
    """One GraphConv(norm='both') layer on the padded node set."""
    Npad, Hin = h_pad.shape
    Hout = w.shape[1]

    # 1) XW = (h @ W) * d_out^-1/2, bf16 for the MXU aggregation (one pass over N).
    # TODO(synk): could be fused into the previous layer's k==last epilogue.
    xw = pl.pallas_call(
        _xw_scale_kernel,
        out_shape=jax.ShapeDtypeStruct((Npad, Hout), jnp.bfloat16),
        grid=(Npad // tm,),
        in_specs=[
            pl.BlockSpec((tm, Hin), lambda i: (i, 0)),
            pl.BlockSpec((Hin, Hout), lambda i: (0, 0)),
            pl.BlockSpec((tm, 1), lambda i: (i, 0)),
        ],
        out_specs=pl.BlockSpec((tm, Hout), lambda i: (i, 0)),
        compiler_params=pltpu.CompilerParams(
            dimension_semantics=("parallel",),
            vmem_limit_bytes=VMEM_LIMIT),
    )(h_pad, w, dinv_out)

    # 2) Block-sparse tiled aggregation with a VMEM accumulator:
    #    out = dinv_in * (A @ XW + XW) + b ; nonzero src blocks walked via the
    #    scalar-prefetched schedule.
    out = pl.pallas_call(
        functools.partial(_gcn_agg_kernel, relu=relu),
        out_shape=jax.ShapeDtypeStruct((Npad, Hout), jnp.float32),
        grid_spec=pltpu.PrefetchScalarGridSpec(
            num_scalar_prefetch=2,
            grid=(Npad // tm, kt),
            in_specs=[
                pl.BlockSpec((tm, tk),
                             lambda i, k, blk, cnt: (i, blk[i * kt + k])),   # A tile
                pl.BlockSpec((tk, Hout),
                             lambda i, k, blk, cnt: (blk[i * kt + k], 0)),   # XW (contraction)
                pl.BlockSpec((tm, Hout), lambda i, k, blk, cnt: (i, 0)),     # XW (self-loop)
                pl.BlockSpec((tm, 1), lambda i, k, blk, cnt: (i, 0)),        # d_in^-1/2
                pl.BlockSpec((1, Hout), lambda i, k, blk, cnt: (0, 0)),      # bias
            ],
            out_specs=pl.BlockSpec((tm, Hout), lambda i, k, blk, cnt: (i, 0)),
            scratch_shapes=[pltpu.VMEM((tm, Hout), jnp.float32)]),
        compiler_params=pltpu.CompilerParams(
            # TODO(synk): on v7x consider pltpu.CORE_PARALLEL on the dst axis if
            # profiling shows one TensorCore idle.
            dimension_semantics=("parallel", "arbitrary"),
            vmem_limit_bytes=VMEM_LIMIT),
    )(blkids, counts, a_bf16, xw, xw, dinv_in, b_row)
    return out


def pallas_score_predictor(h, he, src, dst, w1T, b1_col, w2T, b2_11, *, te=512):
    """score = W2( relu( W1([h_src, h_dst, e]) ) ), edges on the lane axis."""
    E = src.shape[0]
    H = h.shape[1]
    H1 = w1T.shape[0]
    te = min(te, _round_up(E, 128))
    Epad = _round_up(E, te)
    pad = Epad - E
    srcp = jnp.pad(src, (0, pad))
    dstp = jnp.pad(dst, (0, pad))
    hep = jnp.pad(he, ((0, pad), (0, 0)))

    # TODO(synk): the gather could be moved in-kernel (scalar-prefetched edge ids
    # + DMA row gather); kept in XLA glue for robustness.
    hcatT = jnp.concatenate([h[srcp], h[dstp], hep], axis=1).T   # [3H, Epad]

    n_tiles = Epad // te
    out = pl.pallas_call(
        _score_kernel,
        out_shape=jax.ShapeDtypeStruct((1, Epad), jnp.float32),
        grid=(n_tiles,),
        in_specs=[
            pl.BlockSpec((3 * H, te), lambda j: (0, j)),
            pl.BlockSpec((H1, 3 * H), lambda j: (0, 0)),
            pl.BlockSpec((H1, 1), lambda j: (0, 0)),
            pl.BlockSpec((1, H1), lambda j: (0, 0)),
            pl.BlockSpec((1, 1), lambda j: (0, 0)),
        ],
        out_specs=pl.BlockSpec((1, te), lambda j: (0, j)),
        compiler_params=pltpu.CompilerParams(
            dimension_semantics=("parallel",),
            vmem_limit_bytes=VMEM_LIMIT),
    )(hcatT, w1T, b1_col, w2T, b2_11)
    return out.reshape(Epad, 1)[:E]


# ----------------------------------------------------------------------------
# Parameter init (PyTorch-style uniform(-1/sqrt(fan_in), 1/sqrt(fan_in)))
# ----------------------------------------------------------------------------
def init_linear(key, fan_in, fan_out):
    kw, kb = jax.random.split(key)
    bound = 1.0 / jnp.sqrt(fan_in)
    w = jax.random.uniform(kw, (fan_in, fan_out), jnp.float32, -bound, bound)
    b = jax.random.uniform(kb, (fan_out,), jnp.float32, -bound, bound)
    return w, b


class GCNModelPallas:
    def __init__(self, node_features, edge_features, hidden_features,
                 hidden_edge_features, num_layers, hidden_edge_scores,
                 normalization, nb_pos_enc, key, dropout=None, directed=True,
                 agg_tm=256, agg_tk_max=2048):
        # TODO(synk): `normalization` / `dropout` semantics of the reference
        # processor are unknown; ignored (inference-style forward).
        del normalization, dropout, nb_pos_enc
        self.directed = directed
        self.num_layers = num_layers
        self.agg_tm = agg_tm
        self.agg_tk_max = agg_tk_max
        hidden_node_features = hidden_edge_features
        keys = jax.random.split(key, 6 + num_layers)

        def enc(k1, k2, fin, fmid, fout):
            w1, b1 = init_linear(k1, fin, fmid)
            w2, b2 = init_linear(k2, fmid, fout)
            return (w1, b1.reshape(1, fmid), w2, b2.reshape(1, fout))

        self.node_enc = enc(keys[0], keys[1], node_features,
                            hidden_node_features, hidden_features)
        self.edge_enc = enc(keys[2], keys[3], edge_features,
                            hidden_edge_features, hidden_features)

        self.gcn = []
        for i in range(num_layers):
            w, b = init_linear(keys[4 + i], hidden_features, hidden_features)
            self.gcn.append((w, b.reshape(1, hidden_features)))

        # ScorePredictor weights: pre-transposed / pre-reshaped once (hoisted
        # out of the per-forward hot path).
        w1, b1 = init_linear(keys[4 + num_layers], 3 * hidden_features,
                             hidden_edge_scores)
        w2, b2 = init_linear(keys[5 + num_layers], hidden_edge_scores, 1)
        self.pred_w1T = jnp.asarray(w1.T)                    # [H1, 3H]
        self.pred_b1_col = b1.reshape(hidden_edge_scores, 1)
        self.pred_w2T = jnp.asarray(w2.T)                    # [1, H1]
        self.pred_b2 = b2.reshape(1, 1)

    def _agg_tiles(self, num_nodes):
        # tk in {256, 512, ..., 2048}; tm = 256 (<= tk), so tm | tk | Npad.
        tk = min(self.agg_tk_max, _round_up(max(num_nodes, 1), 256))
        tm = min(self.agg_tm, tk)
        return tm, tk

    def forward(self, src, dst, num_nodes, x, e, pe):
        del x  # reference forward ignores `x`; node features come from `pe`

        # --- fused node / edge encoders (one Pallas call each) ---------------
        h = pallas_encoder(pe, *self.node_enc)
        he = pallas_encoder(e, *self.edge_enc)

        # --- graph tensors (built once, reused by every GCN layer) -----------
        if self.directed:
            src_g, dst_g = src, dst
        else:  # add_reverse_edges before the processor (predictor keeps originals)
            src_g = jnp.concatenate([src, dst])
            dst_g = jnp.concatenate([dst, src])

        tm, tk = self._agg_tiles(num_nodes)
        Npad = _round_up(num_nodes, tk)          # divisible by both tm and tk

        # Single multi-edge-count adjacency (self-loop + both degree norms are
        # folded into the GCN kernel).
        # TODO(synk): A storage is still dense O(N^2) bf16 in HBM; the block-sparse
        # walk below only avoids DMA/MXU work for zero blocks. Counts > 256 lose
        # exactness when cast to bf16.
        a = jnp.zeros((Npad, Npad), jnp.float32).at[dst_g, src_g].add(1.0)
        a_bf16 = a.astype(jnp.bfloat16)

        deg_out = jnp.zeros((Npad,), jnp.float32).at[src_g].add(1.0) + 1.0  # +self-loop
        deg_in = jnp.zeros((Npad,), jnp.float32).at[dst_g].add(1.0) + 1.0   # +self-loop
        dinv_out = (1.0 / jnp.sqrt(deg_out)).reshape(Npad, 1)
        dinv_in = (1.0 / jnp.sqrt(deg_in)).reshape(Npad, 1)

        blkids, counts, kt = _build_block_schedule(src_g, dst_g, Npad, tm, tk)

        # --- GCN processor (block-sparse Pallas aggregation per layer) --------
        h_pad = jnp.pad(h, ((0, Npad - num_nodes), (0, 0)))
        for i, (w, b_row) in enumerate(self.gcn):
            relu = i != self.num_layers - 1
            h_pad = pallas_gcn_layer(h_pad, a_bf16, dinv_out, dinv_in, w, b_row,
                                     blkids, counts, kt, relu=relu, tm=tm, tk=tk)
        h = h_pad[:num_nodes]
        # TODO(synk): edge features pass through the processor unchanged.

        # --- edge score predictor on the ORIGINAL edges -----------------------
        return pallas_score_predictor(h, he, src, dst, self.pred_w1T,
                                      self.pred_b1_col, self.pred_w2T,
                                      self.pred_b2)


# ----------------------------------------------------------------------------
if __name__ == "__main__":
    key = jax.random.PRNGKey(0)
    k_in, k_model = jax.random.split(key)

    # Small shapes consistent with the module.
    num_nodes = 16
    num_edges = 32
    node_features = 8        # == nb_pos_enc (forward feeds `pe` into linear1_node)
    edge_features = 4
    hidden_features = 32
    hidden_edge_features = 16
    hidden_edge_scores = 16
    num_layers = 2
    nb_pos_enc = 8

    # Deterministic synthetic directed graph (edge list).
    src = jnp.arange(num_edges, dtype=jnp.int32) % num_nodes
    dst = (3 * jnp.arange(num_edges, dtype=jnp.int32) + 1) % num_nodes

    kx, ke, kpe = jax.random.split(k_in, 3)
    x = jax.random.normal(kx, (num_nodes, node_features), jnp.float32)   # unused
    e = jax.random.normal(ke, (num_edges, edge_features), jnp.float32)
    pe = jax.random.normal(kpe, (num_nodes, nb_pos_enc), jnp.float32)

    model = GCNModelPallas(node_features, edge_features, hidden_features,
                           hidden_edge_features, num_layers, hidden_edge_scores,
                           normalization=None, nb_pos_enc=nb_pos_enc,
                           key=k_model, directed=True)

    scores = model.forward(src, dst, num_nodes, x, e, pe)
    jax.block_until_ready(scores)
    assert scores.shape == (num_edges, 1)
    print("KERNEL_OK")
</pallas_src>

<mosaic_0001>
module attributes {stable_mosaic.version = 11 : i64} {
  func.func @_encoder_kernel(%arg0: i32, %arg1: memref<16x8xf32, #tpu.memory_space<vmem>>, %arg2: memref<8x16xf32, #tpu.memory_space<vmem>>, %arg3: memref<1x16xf32, #tpu.memory_space<vmem>>, %arg4: memref<16x32xf32, #tpu.memory_space<vmem>>, %arg5: memref<1x32xf32, #tpu.memory_space<vmem>>, %arg6: memref<16x32xf32, #tpu.memory_space<vmem>>) attributes {dimension_semantics = [#tpu.dimension_semantics<parallel>], iteration_bounds = array<i64: 1>, scalar_prefetch = 0 : i64, scratch_operands = 0 : i64, tpu.core_type = #tpu.core_type<tc>, window_params = [{transform_indices = @transform_0, window_bounds = array<i64: 16, 8>}, {pipeline_mode = #tpu.pipeline_mode<synchronous>, transform_indices = @transform_1, window_bounds = array<i64: 8, 16>}, {pipeline_mode = #tpu.pipeline_mode<synchronous>, transform_indices = @transform_2, window_bounds = array<i64: 1, 16>}, {pipeline_mode = #tpu.pipeline_mode<synchronous>, transform_indices = @transform_3, window_bounds = array<i64: 16, 32>}, {pipeline_mode = #tpu.pipeline_mode<synchronous>, transform_indices = @transform_4, window_bounds = array<i64: 1, 32>}, {transform_indices = @transform_5, window_bounds = array<i64: 16, 32>}]} {
    %c0 = arith.constant 0 : index
    %c0_0 = arith.constant 0 : index
    %0 = vector.load %arg1[%c0, %c0_0] : memref<16x8xf32, #tpu.memory_space<vmem>>, vector<16x8xf32>
    %c0_1 = arith.constant 0 : index
    %c0_2 = arith.constant 0 : index
    %1 = vector.load %arg2[%c0_1, %c0_2] : memref<8x16xf32, #tpu.memory_space<vmem>>, vector<8x16xf32>
    %cst = arith.constant dense<0.000000e+00> : vector<16x16xf32>
    %2 = tpu.matmul %0, %1, %cst {dimension_numbers = #tpu.dot_dimension_numbers<[1], [0], [0], [1], [0, 0, 1, 1], [], []>} : vector<16x8xf32>, vector<8x16xf32>, vector<16x16xf32> -> vector<16x16xf32>
    %c0_3 = arith.constant 0 : index
    %c0_4 = arith.constant 0 : index
    %3 = vector.load %arg3[%c0_3, %c0_4] : memref<1x16xf32, #tpu.memory_space<vmem>>, vector<1x16xf32>
    %4 = vector.broadcast %3 : vector<1x16xf32> to vector<16x16xf32>
    %5 = arith.addf %2, %4 : vector<16x16xf32>
    %cst_5 = arith.constant 0.000000e+00 : f32
    %6 = vector.broadcast %cst_5 : f32 to vector<16x16xf32>
    %7 = arith.maximumf %5, %6 : vector<16x16xf32>
    %c0_6 = arith.constant 0 : index
    %c0_7 = arith.constant 0 : index
    %8 = vector.load %arg4[%c0_6, %c0_7] : memref<16x32xf32, #tpu.memory_space<vmem>>, vector<16x32xf32>
    %cst_8 = arith.constant dense<0.000000e+00> : vector<16x32xf32>
    %9 = tpu.matmul %7, %8, %cst_8 {dimension_numbers = #tpu.dot_dimension_numbers<[1], [0], [0], [1], [0, 0, 1, 1], [], []>} : vector<16x16xf32>, vector<16x32xf32>, vector<16x32xf32> -> vector<16x32xf32>
    %c0_9 = arith.constant 0 : index
    %c0_10 = arith.constant 0 : index
    %10 = vector.load %arg5[%c0_9, %c0_10] : memref<1x32xf32, #tpu.memory_space<vmem>>, vector<1x32xf32>
    %11 = vector.broadcast %10 : vector<1x32xf32> to vector<16x32xf32>
    %12 = arith.addf %9, %11 : vector<16x32xf32>
    %c0_11 = arith.constant 0 : index
    %c0_12 = arith.constant 0 : index
    %13 = vector.load %arg6[%c0_11, %c0_12] : memref<16x32xf32, #tpu.memory_space<vmem>>, vector<16x32xf32>
    tpu.vector_store %arg6[%c0_11, %c0_12], %12 {strides = array<i32>} : memref<16x32xf32, #tpu.memory_space<vmem>>, vector<16x32xf32>,
    return
  }
  func.func @transform_0(%arg0: i32) -> (i32, i32) {
    %c0_i32 = arith.constant 0 : i32
    %c0_i32_0 = arith.constant 0 : i32
    return %arg0, %c0_i32 : i32, i32
  }
  func.func @transform_1(%arg0: i32) -> (i32, i32) {
    %c0_i32 = arith.constant 0 : i32
    %c0_i32_0 = arith.constant 0 : i32
    %c0_i32_1 = arith.constant 0 : i32
    return %c0_i32, %c0_i32_0 : i32, i32
  }
  func.func @transform_2(%arg0: i32) -> (i32, i32) {
    %c0_i32 = arith.constant 0 : i32
    %c0_i32_0 = arith.constant 0 : i32
    %c0_i32_1 = arith.constant 0 : i32
    return %c0_i32, %c0_i32_0 : i32, i32
  }
  func.func @transform_3(%arg0: i32) -> (i32, i32) {
    %c0_i32 = arith.constant 0 : i32
    %c0_i32_0 = arith.constant 0 : i32
    %c0_i32_1 = arith.constant 0 : i32
    return %c0_i32, %c0_i32_0 : i32, i32
  }
  func.func @transform_4(%arg0: i32) -> (i32, i32) {
    %c0_i32 = arith.constant 0 : i32
    %c0_i32_0 = arith.constant 0 : i32
    %c0_i32_1 = arith.constant 0 : i32
    return %c0_i32, %c0_i32_0 : i32, i32
  }
  func.func @transform_5(%arg0: i32) -> (i32, i32) {
    %c0_i32 = arith.constant 0 : i32
    %c0_i32_0 = arith.constant 0 : i32
    return %arg0, %c0_i32 : i32, i32
  }
}

</mosaic_0001>

<llo_original>
// kernel: tpu_custom_call.1
$region0: #{tpu_custom_call.1}
  #allocation0 [shape = 'u32[]', space=smem, size = 0x4, offset = 0x4, fixed_abs, tag = 'smem constant byte address 0x4 - core index']
  #allocation1 [shape = 'u32[144,128]{1,0:T(1,128)}', space=vmem, size = 0x12000, scoped, tag = 'internal scratch']
  %s0 = inlined_call_operand.vmem [shape: f32[16,8], index: 0, kind: input, shape index: {}]
  %s1 = inlined_call_operand.vmem [shape: f32[8,16], index: 1, kind: input, shape index: {}]
  %s2 = inlined_call_operand.vmem [shape: f32[1,16], index: 2, kind: input, shape index: {}]
  %s3 = inlined_call_operand.vmem [shape: f32[16,32], index: 3, kind: input, shape index: {}]
  %s4 = inlined_call_operand.vmem [shape: f32[1,32], index: 4, kind: input, shape index: {}]
  %s5 = inlined_call_operand.hbm [shape: f32[16,32], index: 5, kind: output, shape index: {}]
  %s6 = sld [smem:[#allocation0]]
  $region30: #{tpu_custom_call.1} parent=0
    _
  %s8 = ssub.s32 1, %s6
  %s9 = scalar_select 0, %s8, %s6
  $region1: #{tpu_custom_call.1} parent=0
    #allocation2 [shape = 'u8[8192]{0}', space=vmem, size = 0x2000, scoped, tag = 'output window, operand 0, single buffered']
    #allocation3 [shape = 's32[1]{0}', space=sflag, size = 0x4, scoped, tag = 'scoped memory for tpu_custom_call.1']
    %10 = vsyncpa [#allocation3], 0
    // Predicated region
    $region2: #{tpu_custom_call.1} parent=1 // pred_check
      _
    $region3: #{tpu_custom_call.1} parent=1 // pred_check_branch
      %12 = sbr.rel (0) target = $region5
    $region4: #{tpu_custom_call.1} parent=1 // pred_region
      _
    $region5: #{tpu_custom_call.1} parent=1 // pred_fallthru
      _
    // Predicated region
    $region6: #{tpu_custom_call.1} parent=1 // pred_check
      _
    $region7: #{tpu_custom_call.1} parent=1 // pred_check_branch
      %14 = sbr.rel (0) target = $region9
    $region8: #{tpu_custom_call.1} parent=1 // pred_region
      _
    $region9: #{tpu_custom_call.1} parent=1 // pred_fallthru
      _
    // Predicated region
    $region10: #{tpu_custom_call.1} parent=1 // pred_check
      _
    $region11: #{tpu_custom_call.1} parent=1 // pred_check_branch
      %16 = sbr.rel (0) target = $region13
    $region12: #{tpu_custom_call.1} parent=1 // pred_region
      _
    $region13: #{tpu_custom_call.1} parent=1 // pred_fallthru
      _
    // Predicated region
    $region14: #{tpu_custom_call.1} parent=1 // pred_check
      _
    $region15: #{tpu_custom_call.1} parent=1 // pred_check_branch
      %18 = sbr.rel (0) target = $region17
    $region16: #{tpu_custom_call.1} parent=1 // pred_region
      _
    $region17: #{tpu_custom_call.1} parent=1 // pred_fallthru
      _
    // Predicated region
    $region18: #{tpu_custom_call.1} parent=1 // pred_check
      _
    $region19: #{tpu_custom_call.1} parent=1 // pred_check_branch
      %20 = sbr.rel (0) target = $region21
    $region20: #{tpu_custom_call.1} parent=1 // pred_region
      _
    $region21: #{tpu_custom_call.1} parent=1 // pred_fallthru
      _
    %v21 = vld [vmem:[%s0] sm:$0xff]
    %v22 = vld [vmem:[%s0 + $0x8] sm:$0xff]
    %v23 = vld [vmem:[%s1] sm:$0xff]
    %v24 = vld [vmem:[%s2] sm:$0x1]
    %v26 = vlaneseq
    %v27 = vshrl.u32 %v26, 7
    %v28 = vsub.s32 0, %v27
    %v29 = vrot.slane %v24, %v28
    %vm31 = vcmask 64512
    %v33 = vsel %vm31, %v21, 0
    %v36 = vsel %vm31, %v22, 0
    %38 = vmatprep.subr.mxu0 0.0
    %39 = vmatpush1.msra.mxu0 %v23
    %40 = vmatprep.subr.mxu0 0.0
    %41 = vmatpush1.msra.mxu0 0.0
    %42 = vmatprep.subr.mxu0 0.0
    %43 = vmatpush1.msra.mxu0 0.0
    %44 = vmatprep.subr.mxu0 0.0
    %45 = vmatpush1.msra.mxu0 0.0
    %46 = vmatprep.subr.mxu0 0.0
    %47 = vmatpush1.msra.mxu0 0.0
    %48 = vmatprep.subr.mxu0 0.0
    %49 = vmatpush1.msra.mxu0 0.0
    %50 = vmatprep.subr.mxu0 0.0
    %51 = vmatpush1.msra.mxu0 0.0
    %52 = vmatprep.subr.mxu0 0.0
    %53 = vmatpush1.msra.mxu0 0.0
    %54 = vmatprep.subr.mxu0 0.0
    %55 = vmatpush1.msra.mxu0 0.0
    %56 = vmatprep.subr.mxu0 0.0
    %57 = vmatpush1.msra.mxu0 0.0
    %58 = vmatprep.subr.mxu0 0.0
    %59 = vmatpush1.msra.mxu0 0.0
    %60 = vmatprep.subr.mxu0 0.0
    %61 = vmatpush1.msra.mxu0 0.0
    %62 = vmatprep.subr.mxu0 0.0
    %63 = vmatpush1.msra.mxu0 0.0
    %64 = vmatprep.subr.mxu0 0.0
    %65 = vmatpush1.msra.mxu0 0.0
    %66 = vmatprep.subr.mxu0 0.0
    %67 = vmatpush1.msra.mxu0 0.0
    %68 = vmatprep.subr.mxu0 0.0
    %69 = vmatpush1.msra.mxu0 0.0
    %70 = vmatprep.subr.mxu0 0.0
    %71 = vmatpush1.msra.mxu0 0.0
    %72 = vmatprep.subr.mxu0 0.0
    %73 = vmatpush1.msra.mxu0 0.0
    %74 = vmatprep.subr.mxu0 0.0
    %75 = vmatpush1.msra.mxu0 0.0
    %76 = vmatprep.subr.mxu0 0.0
    %77 = vmatpush1.msra.mxu0 0.0
    %78 = vmatprep.subr.mxu0 0.0
    %79 = vmatpush1.msra.mxu0 0.0
    %80 = vmatprep.subr.mxu0 0.0
    %81 = vmatpush1.msra.mxu0 0.0
    %82 = vmatprep.subr.mxu0 0.0
    %83 = vmatpush1.msra.mxu0 0.0
    %84 = vmatprep.subr.mxu0 0.0
    %85 = vmatpush1.msra.mxu0 0.0
    %86 = vmatprep.subr.mxu0 0.0
    %87 = vmatpush1.msra.mxu0 0.0
    %88 = vmatprep.subr.mxu0 0.0
    %89 = vmatpush1.msra.mxu0 0.0
    %90 = vmatprep.subr.mxu0 0.0
    %91 = vmatpush1.msra.mxu0 0.0
    %92 = vmatprep.subr.mxu0 0.0
    %93 = vmatpush1.msra.mxu0 0.0
    %94 = vmatprep.subr.mxu0 0.0
    %95 = vmatpush1.msra.mxu0 0.0
    %96 = vmatprep.subr.mxu0 0.0
    %97 = vmatpush1.msra.mxu0 0.0
    %98 = vmatprep.subr.mxu0 0.0
    %99 = vmatpush1.msra.mxu0 0.0
    %100 = vmatprep.subr.mxu0 0.0
    %101 = vmatpush1.msra.mxu0 0.0
    %102 = vmatprep.mubr.f32.mxu0 0.0
    %103 = vmatmul.mubr.f32.gmra.mrb[0].mxu0 %v33
    %v104 = vpop.f32.mrb[0].mxu0
    %v105 = vadd.f32 %v29, %v104
    %v106 = vpop.f32.mrb[0].mxu0
    %107 = vmatprep.mubr.f32.mxu0 0.0
    %108 = vmatmul.mubr.f32.gmra.mrb[0].mxu0 %v36
    %v109 = vpop.f32.mrb[0].mxu0
    %v110 = vadd.f32 %v29, %v109
    %v111 = vpop.f32.mrb[0].mxu0
    %112 = vdwg.mxu0
    %v113 = vmax.f32 %v105, 0.0
    %v114 = vmax.f32 %v110, 0.0
    %v115 = vld [vmem:[%s3] sm:$0xff]
    %v116 = vld [vmem:[%s3 + $0x8] sm:$0xff]
    %v117 = vld [vmem:[%s4] sm:$0x1]
    %v119 = vlaneseq
    %v120 = vshrl.u32 %v119, 7
    %v121 = vsub.s32 0, %v120
    %v122 = vrot.slane %v117, %v121
    %vm124 = vcmask 130048
    %v126 = vsel %vm124, %v113, 0
    %v129 = vsel %vm124, %v114, 0
    %131 = vmatprep.subr.mxu0 0.0
    %132 = vmatpush1.msra.mxu0 %v115
    %133 = vmatprep.subr.mxu0 0.0
    %134 = vmatpush1.msra.mxu0 %v116
    %135 = vmatprep.subr.mxu0 0.0
    %136 = vmatpush1.msra.mxu0 0.0
    %137 = vmatprep.subr.mxu0 0.0
    %138 = vmatpush1.msra.mxu0 0.0
    %139 = vmatprep.subr.mxu0 0.0
    %140 = vmatpush1.msra.mxu0 0.0
    %141 = vmatprep.subr.mxu0 0.0
    %142 = vmatpush1.msra.mxu0 0.0
    %143 = vmatprep.subr.mxu0 0.0
    %144 = vmatpush1.msra.mxu0 0.0
    %145 = vmatprep.subr.mxu0 0.0
    %146 = vmatpush1.msra.mxu0 0.0
    %147 = vmatprep.subr.mxu0 0.0
    %148 = vmatpush1.msra.mxu0 0.0
    %149 = vmatprep.subr.mxu0 0.0
    %150 = vmatpush1.msra.mxu0 0.0
    %151 = vmatprep.subr.mxu0 0.0
    %152 = vmatpush1.msra.mxu0 0.0
    %153 = vmatprep.subr.mxu0 0.0
    %154 = vmatpush1.msra.mxu0 0.0
    %155 = vmatprep.subr.mxu0 0.0
    %156 = vmatpush1.msra.mxu0 0.0
    %157 = vmatprep.subr.mxu0 0.0
    %158 = vmatpush1.msra.mxu0 0.0
    %159 = vmatprep.subr.mxu0 0.0
    %160 = vmatpush1.msra.mxu0 0.0
    %161 = vmatprep.subr.mxu0 0.0
    %162 = vmatpush1.msra.mxu0 0.0
    %163 = vmatprep.subr.mxu0 0.0
    %164 = vmatpush1.msra.mxu0 0.0
    %165 = vmatprep.subr.mxu0 0.0
    %166 = vmatpush1.msra.mxu0 0.0
    %167 = vmatprep.subr.mxu0 0.0
    %168 = vmatpush1.msra.mxu0 0.0
    %169 = vmatprep.subr.mxu0 0.0
    %170 = vmatpush1.msra.mxu0 0.0
    %171 = vmatprep.subr.mxu0 0.0
    %172 = vmatpush1.msra.mxu0 0.0
    %173 = vmatprep.subr.mxu0 0.0
    %174 = vmatpush1.msra.mxu0 0.0
    %175 = vmatprep.subr.mxu0 0.0
    %176 = vmatpush1.msra.mxu0 0.0
    %177 = vmatprep.subr.mxu0 0.0
    %178 = vmatpush1.msra.mxu0 0.0
    %179 = vmatprep.subr.mxu0 0.0
    %180 = vmatpush1.msra.mxu0 0.0
    %181 = vmatprep.subr.mxu0 0.0
    %182 = vmatpush1.msra.mxu0 0.0
    %183 = vmatprep.subr.mxu0 0.0
    %184 = vmatpush1.msra.mxu0 0.0
    %185 = vmatprep.subr.mxu0 0.0
    %186 = vmatpush1.msra.mxu0 0.0
    %187 = vmatprep.subr.mxu0 0.0
    %188 = vmatpush1.msra.mxu0 0.0
    %189 = vmatprep.subr.mxu0 0.0
    %190 = vmatpush1.msra.mxu0 0.0
    %191 = vmatprep.subr.mxu0 0.0
    %192 = vmatpush1.msra.mxu0 0.0
    %193 = vmatprep.subr.mxu0 0.0
    %194 = vmatpush1.msra.mxu0 0.0
    %195 = vmatprep.mubr.f32.mxu0 0.0
    %196 = vmatmul.mubr.f32.gmra.mrb[0].mxu0 %v126
    %v197 = vpop.f32.mrb[0].mxu0
    %v198 = vadd.f32 %v122, %v197
    %v199 = vpop.f32.mrb[0].mxu0
    %200 = vmatprep.mubr.f32.mxu0 0.0
    %201 = vmatmul.mubr.f32.gmra.mrb[0].mxu0 %v129
    %v202 = vpop.f32.mrb[0].mxu0
    %v203 = vadd.f32 %v122, %v202
    %v204 = vpop.f32.mrb[0].mxu0
    %205 = vdwg.mxu0
    %vm206 = vcmask 261120
    %207 = vst.msk [vmem:[#allocation2] sm:$0xff] %vm206, %v198
    %208 = vst.msk [vmem:[#allocation2 + $0x8] sm:$0xff] %vm206, %v203
    // Predicated region
    $region22: #{tpu_custom_call.1} parent=1 // pred_check
      _
    $region23: #{tpu_custom_call.1} parent=1 // pred_check_branch
      %210 = sbr.rel (0) target = $region25
    $region24: #{tpu_custom_call.1} parent=1 // pred_region
      %s212 = ssub.s32 256, 256
      %213 = vsyncadd [#allocation3], %s212
      %s214 = sshll.u32 [#allocation2], 4
      %s215 = int_to_ptr.vmem [resolvable:$true] %s214
      %220 = dma.vmem_to_hbm [thread:$0]  %s215, 256, %s5, [#allocation3], 128, 128, 8
    $region25: #{tpu_custom_call.1} parent=1 // pred_fallthru
      _
    // Predicated region
    $region26: #{tpu_custom_call.1} parent=1 // pred_check
      _
    $region27: #{tpu_custom_call.1} parent=1 // pred_check_branch
      %222 = sbr.rel (0) target = $region29
    $region28: #{tpu_custom_call.1} parent=1 // pred_region
      %223 = dma.done [#allocation3], 256
    $region29: #{tpu_custom_call.1} parent=1 // pred_fallthru
      _
    %224 = vsyncpa [#allocation3], 1

</llo_original>
